<compile_context>
chip_gen: v7x
topology: tpu7x:2x2x1
jax: 0.10.0
libtpu: 0.0.40
codegen_flags: <defaults>
</compile_context>

<pallas_src>
import jax
import jax.numpy as jnp
from jax.experimental import pallas as pl
from jax.experimental.pallas import tpu as pltpu


# --------------------------------------------------------------------------
# Kernel
# --------------------------------------------------------------------------
def _pad_lanes(x, target):
    """Zero-pad the last (lane) dim of `x` to `target` (static)."""
    pad = target - x.shape[-1]
    if pad == 0:
        return x
    zeros = jnp.zeros(x.shape[:-1] + (pad,), x.dtype)
    return jnp.concatenate([x, zeros], axis=-1)


def phrase_attn_kernel(ctx_ref, emb_ref, lab_ref, w_ref, attn_ref, wemb_ref):
    ctx = ctx_ref[...].astype(jnp.float32)        # (Bt, S, D)
    emb = emb_ref[...].astype(jnp.float32)        # (Bt, S, E)
    labels = lab_ref[...]                         # (Bt, S) int32
    w = w_ref[...]                                # (1, D)  f32

    # Label mask computed on the VPU (free filler under the DMAs); no float
    # mask is streamed from HBM.
    mask = (labels != 0).astype(jnp.float32)      # (Bt, S)

    # fc(context).squeeze(-1): broadcast-multiply + lane reduce over D (an
    # (S, D) @ (D, 1) matmul would use 1/256 of the MXU columns).
    scores = jnp.sum(ctx * w[jnp.newaxis, :, :], axis=-1)      # (Bt, S)

    # Fused masked softmax over the sequence (lane) axis:
    #   softmax -> *mask -> renormalize  ==  exp(x - max) * mask / sum(...)
    # (the first normalization cancels; the fc bias is dropped because
    # softmax is shift-invariant).
    m = jnp.max(scores, axis=-1, keepdims=True)                # (Bt, 1)
    e = jnp.exp(scores - m) * mask                             # (Bt, S)
    denom = jnp.sum(e, axis=-1, keepdims=True)                 # (Bt, 1)

    # Approximate reciprocal on the EUP slot + one Newton step for full f32
    # accuracy.
    inv = pl.reciprocal(denom, approx=True)
    inv = inv * (2.0 - denom * inv)
    a = e * inv                                                # (Bt, S)

    # Lane-dense, unmasked stores: pad to the 128-multiple output width.
    attn_ref[...] = _pad_lanes(a, attn_ref.shape[-1])

    # weighted_emb[b, e] = sum_s a[b, s] * emb[b, s, e]
    # Broadcast-multiply + sublane reduce over S (E stays on lanes).
    wemb = jnp.sum(a[:, :, jnp.newaxis] * emb, axis=1)         # (Bt, E)
    wemb_ref[...] = _pad_lanes(wemb, wemb_ref.shape[-1])


# --------------------------------------------------------------------------
# Tile sizing helpers
# --------------------------------------------------------------------------
def _round_up(x, m):
    return ((x + m - 1) // m) * m


def _vmem_capacity_bytes():
    try:
        return int(pltpu.get_tpu_info().vmem_capacity_bytes)
    except Exception:
        return 64 << 20   # conservative (v7x per-TC size)


def _per_batch_vmem_bytes(S, D, E, S_pad, E_pad, in_bytes):
    """Per-batch-row VMEM working set (double-buffered I/O + temporaries)."""
    inputs = S * (D + E) * in_bytes + S * 4          # context + embedded + labels
    outputs = (S_pad + E_pad) * 4                    # attn + weighted_emb (padded)
    temps = S * (D + E) * 4                          # ctx*w and a*emb products (f32)
    return 2 * (inputs + outputs) + temps


def _pick_batch_tile(B, S, D, E, S_pad, E_pad, vmem_cap, in_bytes):
    per_batch = _per_batch_vmem_bytes(S, D, E, S_pad, E_pad, in_bytes)
    budget = int(vmem_cap * 0.35)       # ~45 MiB on 128 MiB VMEM, ~22 MiB on 64 MiB
    cap = max(1, budget // per_batch)

    if B <= cap or B < 8:
        bt = B
    else:
        # Largest 8-aligned tile within budget (multiple of 8 keeps the 2-D
        # (bt, S_pad)/(bt, E_pad) blocks sublane-aligned; Pallas masks the
        # partial last tile if bt does not divide B).
        bt = max(8, (cap // 8) * 8)

    # Keep >= 2 grid steps so the "parallel" batch axis can shard across the
    # two TensorCores on v7x (costs one extra ~0.35us step on 1-TC chips).
    if bt >= B and B >= 16:
        bt = max(8, (((B + 1) // 2) // 8) * 8)

    return bt


# --------------------------------------------------------------------------
# Wrapper
# --------------------------------------------------------------------------
def phrase_attention(context, embedded, input_labels, w, b=None, *, bt=None):
    """context (B,S,D), embedded (B,S,E) (f32 or bf16), input_labels (B,S) int,
    w (D,1) f32, b unused (softmax shift-invariance)
    -> (attn (B,S) f32, weighted_emb (B,E) f32)"""
    B, S, D = context.shape
    E = embedded.shape[2]
    S_pad = _round_up(S, 128)
    E_pad = _round_up(E, 128)

    if input_labels.dtype != jnp.int32:
        input_labels = input_labels.astype(jnp.int32)
    w_row = jnp.reshape(w, (1, D)).astype(jnp.float32)
    del b  # softmax is shift-invariant; the bias cannot change the outputs.

    in_bytes = jnp.dtype(context.dtype).itemsize      # bf16 inputs stream at 2 B
    vmem_cap = _vmem_capacity_bytes()
    if bt is None:
        bt = _pick_batch_tile(B, S, D, E, S_pad, E_pad, vmem_cap, in_bytes)

    per_batch = _per_batch_vmem_bytes(S, D, E, S_pad, E_pad, in_bytes)
    vmem_limit = int(min(vmem_cap, max(16 << 20, bt * per_batch + (4 << 20))))

    grid = (pl.cdiv(B, bt),)

    cost = pl.CostEstimate(
        flops=int(2 * B * S * (D + E) + 8 * B * S),
        transcendentals=int(B * S + B),
        bytes_accessed=int(B * S * (D + E) * in_bytes   # context + embedded
                           + 4 * B * S                  # labels
                           + 4 * D                      # fc weight
                           + 4 * B * (S_pad + E_pad)),  # attn + weighted_emb
    )

    attn_p, wemb_p = pl.pallas_call(
        phrase_attn_kernel,
        out_shape=(
            jax.ShapeDtypeStruct((B, S_pad), jnp.float32),   # attn (lane-padded)
            jax.ShapeDtypeStruct((B, E_pad), jnp.float32),   # weighted_emb (padded)
        ),
        grid_spec=pltpu.PrefetchScalarGridSpec(
            num_scalar_prefetch=0,
            grid=grid,
            in_specs=[
                pl.BlockSpec((bt, S, D), lambda i: (i, 0, 0)),   # context
                pl.BlockSpec((bt, S, E), lambda i: (i, 0, 0)),   # embedded
                pl.BlockSpec((bt, S), lambda i: (i, 0)),         # labels (int32)
                pl.BlockSpec((1, D), lambda i: (0, 0)),          # fc weight
            ],
            out_specs=[
                pl.BlockSpec((bt, S_pad), lambda i: (i, 0)),     # attn
                pl.BlockSpec((bt, E_pad), lambda i: (i, 0)),     # weighted_emb
            ],
        ),
        compiler_params=pltpu.CompilerParams(
            dimension_semantics=("parallel",),                   # shards across TCs on v7x
            vmem_limit_bytes=vmem_limit,
        ),
        cost_estimate=cost,
    )(context, embedded, input_labels, w_row)

    attn = attn_p[:, :S] if S_pad != S else attn_p
    wemb = wemb_p[:, :E] if E_pad != E else wemb_p
    return attn, wemb


# --------------------------------------------------------------------------
# Pure-JAX reference (mirrors the PyTorch module)
# --------------------------------------------------------------------------
def reference(context, embedded, input_labels, w, b):
    scores = jnp.einsum("bsd,do->bso", context, w)[..., 0] + b[0, 0]   # (B,S)
    attn = jax.nn.softmax(scores, axis=1)
    mask = (input_labels != 0).astype(jnp.float32)
    attn = attn * mask
    attn = attn / jnp.sum(attn, axis=1, keepdims=True)
    wemb = jnp.einsum("bs,bse->be", attn, embedded)
    return attn, wemb


if __name__ == "__main__":
    key = jax.random.PRNGKey(0)

    # ---- Test 1: the module's nominal small shapes ------------------------
    B, S, D, E = 2, 8, 32, 16   # batch, seq_len, input_dim, word_vec_size
    k_ctx, k_emb, k_w, k_b = jax.random.split(key, 4)

    context = jax.random.normal(k_ctx, (B, S, D), dtype=jnp.float32)
    embedded = jax.random.normal(k_emb, (B, S, E), dtype=jnp.float32)
    input_labels = jnp.array(
        [[3, 5, 7, 2, 0, 0, 0, 0],
         [1, 4, 9, 6, 2, 8, 0, 0]], dtype=jnp.int32)
    w = jax.random.normal(k_w, (D, 1), dtype=jnp.float32) * 0.1
    b = jax.random.normal(k_b, (1, 1), dtype=jnp.float32) * 0.1

    attn, wemb = phrase_attention(context, embedded, input_labels, w, b)
    attn = jax.block_until_ready(attn)
    wemb = jax.block_until_ready(wemb)

    attn_ref, wemb_ref = reference(context, embedded, input_labels, w, b)
    assert jnp.allclose(attn, attn_ref, atol=1e-5, rtol=1e-5), "attn mismatch"
    assert jnp.allclose(wemb, wemb_ref, atol=1e-5, rtol=1e-5), "weighted_emb mismatch"

    # ---- Test 2: non-divisible batch + forced bt (partial last tile, ------
    # ---- exercises output lane padding and masked partial-tile writes) ----
    B2, S2, D2, E2 = 12, 24, 64, 48
    k2 = jax.random.PRNGKey(1)
    kc2, ke2, kl2, kw2 = jax.random.split(k2, 4)

    ctx2 = jax.random.normal(kc2, (B2, S2, D2), dtype=jnp.float32)
    emb2 = jax.random.normal(ke2, (B2, S2, E2), dtype=jnp.float32)
    lab2 = jax.random.randint(kl2, (B2, S2), 0, 4, dtype=jnp.int32)
    lab2 = lab2.at[:, 0].set(1)          # every row has at least one nonzero label
    w2 = jax.random.normal(kw2, (D2, 1), dtype=jnp.float32) * 0.1
    b2 = jnp.zeros((1, 1), dtype=jnp.float32)

    attn2, wemb2 = phrase_attention(ctx2, emb2, lab2, w2, b2, bt=8)
    attn2 = jax.block_until_ready(attn2)
    wemb2 = jax.block_until_ready(wemb2)

    attn2_ref, wemb2_ref = reference(ctx2, emb2, lab2, w2, b2)
    assert jnp.allclose(attn2, attn2_ref, atol=1e-5, rtol=1e-5), "attn mismatch (test2)"
    assert jnp.allclose(wemb2, wemb2_ref, atol=1e-5, rtol=1e-5), "weighted_emb mismatch (test2)"

    print("KERNEL_OK")
</pallas_src>

<mosaic_0001>
module attributes {stable_mosaic.version = 11 : i64} {
  func.func @phrase_attn_kernel(%arg0: i32, %arg1: memref<2x8x32xf32, #tpu.memory_space<vmem>>, %arg2: memref<2x8x16xf32, #tpu.memory_space<vmem>>, %arg3: memref<2x8xi32, #tpu.memory_space<vmem>>, %arg4: memref<1x32xf32, #tpu.memory_space<vmem>>, %arg5: memref<2x128xf32, #tpu.memory_space<vmem>>, %arg6: memref<2x128xf32, #tpu.memory_space<vmem>>) attributes {dimension_semantics = [#tpu.dimension_semantics<parallel>], iteration_bounds = array<i64: 1>, scalar_prefetch = 0 : i64, scratch_operands = 0 : i64, tpu.core_type = #tpu.core_type<tc>, window_params = [{transform_indices = @transform_0, window_bounds = array<i64: 2, 8, 32>}, {transform_indices = @transform_1, window_bounds = array<i64: 2, 8, 16>}, {transform_indices = @transform_2, window_bounds = array<i64: 2, 8>}, {pipeline_mode = #tpu.pipeline_mode<synchronous>, transform_indices = @transform_3, window_bounds = array<i64: 1, 32>}, {transform_indices = @transform_4, window_bounds = array<i64: 2, 128>}, {transform_indices = @transform_5, window_bounds = array<i64: 2, 128>}]} {
    %c0 = arith.constant 0 : index
    %c0_0 = arith.constant 0 : index
    %c0_1 = arith.constant 0 : index
    %0 = vector.load %arg1[%c0, %c0_0, %c0_1] : memref<2x8x32xf32, #tpu.memory_space<vmem>>, vector<2x8x32xf32>
    %c0_2 = arith.constant 0 : index
    %c0_3 = arith.constant 0 : index
    %c0_4 = arith.constant 0 : index
    %1 = vector.load %arg2[%c0_2, %c0_3, %c0_4] : memref<2x8x16xf32, #tpu.memory_space<vmem>>, vector<2x8x16xf32>
    %c0_5 = arith.constant 0 : index
    %c0_6 = arith.constant 0 : index
    %2 = vector.load %arg3[%c0_5, %c0_6] : memref<2x8xi32, #tpu.memory_space<vmem>>, vector<2x8xi32>
    %c0_7 = arith.constant 0 : index
    %c0_8 = arith.constant 0 : index
    %3 = vector.load %arg4[%c0_7, %c0_8] : memref<1x32xf32, #tpu.memory_space<vmem>>, vector<1x32xf32>
    %c0_i32 = arith.constant 0 : i32
    %4 = vector.broadcast %c0_i32 : i32 to vector<2x8xi32>
    %5 = arith.cmpi ne, %2, %4 : vector<2x8xi32>
    %6 = arith.extui %5 : vector<2x8xi1> to vector<2x8xi32>
    %7 = arith.sitofp %6 : vector<2x8xi32> to vector<2x8xf32>
    %8 = vector.shape_cast %3 : vector<1x32xf32> to vector<1x1x32xf32>
    %9 = vector.broadcast %8 : vector<1x1x32xf32> to vector<2x8x32xf32>
    %10 = arith.mulf %0, %9 : vector<2x8x32xf32>
    %cst = arith.constant dense<0.000000e+00> : vector<2x8xf32>
    %11 = vector.multi_reduction <add>, %10, %cst [2] : vector<2x8x32xf32> to vector<2x8xf32>
    %cst_9 = arith.constant dense<0xFF800000> : vector<2xf32>
    %12 = vector.multi_reduction <maximumf>, %11, %cst_9 [1] : vector<2x8xf32> to vector<2xf32>
    %13 = vector.shape_cast %12 : vector<2xf32> to vector<2x1xf32>
    %14 = vector.broadcast %13 : vector<2x1xf32> to vector<2x8xf32>
    %15 = arith.subf %11, %14 : vector<2x8xf32>
    %16 = math.exp %15 : vector<2x8xf32>
    %17 = arith.mulf %16, %7 : vector<2x8xf32>
    %cst_10 = arith.constant dense<0.000000e+00> : vector<2xf32>
    %18 = vector.multi_reduction <add>, %17, %cst_10 [1] : vector<2x8xf32> to vector<2xf32>
    %19 = vector.shape_cast %18 : vector<2xf32> to vector<2x1xf32>
    %20 = tpu.reciprocal %19 {approx = true} : vector<2x1xf32> -> vector<2x1xf32>
    %21 = arith.mulf %19, %20 : vector<2x1xf32>
    %cst_11 = arith.constant 2.000000e+00 : f32
    %22 = vector.broadcast %cst_11 : f32 to vector<2x1xf32>
    %23 = arith.subf %22, %21 : vector<2x1xf32>
    %24 = arith.mulf %20, %23 : vector<2x1xf32>
    %25 = vector.broadcast %24 : vector<2x1xf32> to vector<2x8xf32>
    %26 = arith.mulf %17, %25 : vector<2x8xf32>
    %cst_12 = arith.constant 0.000000e+00 : f32
    %27 = vector.broadcast %cst_12 : f32 to vector<2x120xf32>
    %28 = tpu.concatenate %26, %27 in 1 : vector<2x8xf32>, vector<2x120xf32> -> vector<2x128xf32>
    %c0_13 = arith.constant 0 : index
    %c0_14 = arith.constant 0 : index
    %29 = vector.load %arg5[%c0_13, %c0_14] : memref<2x128xf32, #tpu.memory_space<vmem>>, vector<2x128xf32>
    tpu.vector_store %arg5[%c0_13, %c0_14], %28 {strides = array<i32>} : memref<2x128xf32, #tpu.memory_space<vmem>>, vector<2x128xf32>,
    %30 = vector.shape_cast %26 : vector<2x8xf32> to vector<2x8x1xf32>
    %31 = vector.broadcast %30 : vector<2x8x1xf32> to vector<2x8x16xf32>
    %32 = arith.mulf %31, %1 : vector<2x8x16xf32>
    %cst_15 = arith.constant dense<0.000000e+00> : vector<2x16xf32>
    %33 = vector.multi_reduction <add>, %32, %cst_15 [1] : vector<2x8x16xf32> to vector<2x16xf32>
    %cst_16 = arith.constant 0.000000e+00 : f32
    %34 = vector.broadcast %cst_16 : f32 to vector<2x112xf32>
    %35 = tpu.concatenate %33, %34 in 1 : vector<2x16xf32>, vector<2x112xf32> -> vector<2x128xf32>
    %c0_17 = arith.constant 0 : index
    %c0_18 = arith.constant 0 : index
    %36 = vector.load %arg6[%c0_17, %c0_18] : memref<2x128xf32, #tpu.memory_space<vmem>>, vector<2x128xf32>
    tpu.vector_store %arg6[%c0_17, %c0_18], %35 {strides = array<i32>} : memref<2x128xf32, #tpu.memory_space<vmem>>, vector<2x128xf32>,
    return
  }
  func.func @transform_0(%arg0: i32) -> (i32, i32, i32) {
    %c0_i32 = arith.constant 0 : i32
    %c0_i32_0 = arith.constant 0 : i32
    %c0_i32_1 = arith.constant 0 : i32
    return %arg0, %c0_i32, %c0_i32_0 : i32, i32, i32
  }
  func.func @transform_1(%arg0: i32) -> (i32, i32, i32) {
    %c0_i32 = arith.constant 0 : i32
    %c0_i32_0 = arith.constant 0 : i32
    %c0_i32_1 = arith.constant 0 : i32
    return %arg0, %c0_i32, %c0_i32_0 : i32, i32, i32
  }
  func.func @transform_2(%arg0: i32) -> (i32, i32) {
    %c0_i32 = arith.constant 0 : i32
    %c0_i32_0 = arith.constant 0 : i32
    return %arg0, %c0_i32 : i32, i32
  }
  func.func @transform_3(%arg0: i32) -> (i32, i32) {
    %c0_i32 = arith.constant 0 : i32
    %c0_i32_0 = arith.constant 0 : i32
    %c0_i32_1 = arith.constant 0 : i32
    return %c0_i32, %c0_i32_0 : i32, i32
  }
  func.func @transform_4(%arg0: i32) -> (i32, i32) {
    %c0_i32 = arith.constant 0 : i32
    %c0_i32_0 = arith.constant 0 : i32
    return %arg0, %c0_i32 : i32, i32
  }
  func.func @transform_5(%arg0: i32) -> (i32, i32) {
    %c0_i32 = arith.constant 0 : i32
    %c0_i32_0 = arith.constant 0 : i32
    return %arg0, %c0_i32 : i32, i32
  }
}

</mosaic_0001>

<llo_original>
// kernel: tpu_custom_call.1
$region0: #{tpu_custom_call.1}
  #allocation0 [shape = 'u32[]', space=smem, size = 0x4, offset = 0x4, fixed_abs, tag = 'smem constant byte address 0x4 - core index']
  #allocation1 [shape = 'u32[144,128]{1,0:T(1,128)}', space=vmem, size = 0x12000, scoped, tag = 'internal scratch']
  %s0 = inlined_call_operand.hbm [shape: f32[2,8,32], index: 0, kind: input, shape index: {}]
  %s1 = inlined_call_operand.hbm [shape: f32[2,8,16], index: 1, kind: input, shape index: {}]
  %s2 = inlined_call_operand.vmem [shape: s32[2,8], index: 2, kind: input, shape index: {}]
  %s3 = inlined_call_operand.vmem [shape: f32[1,32], index: 3, kind: input, shape index: {}]
  %s4 = inlined_call_operand.hbm [shape: f32[2,128], index: 4, kind: output, shape index: {0}]
  %s5 = inlined_call_operand.hbm [shape: f32[2,128], index: 5, kind: output, shape index: {1}]
  %6 = xla_tuple %s4, %s5
  %s7 = sld [smem:[#allocation0]]
  $region42: #{tpu_custom_call.1} parent=0
    _
  %s9 = ssub.s32 1, %s7
  %s10 = scalar_select 0, %s9, %s7
  $region1: #{tpu_custom_call.1} parent=0
    #allocation2 [shape = 'u8[8192]{0}', space=vmem, size = 0x2000, scoped, tag = 'input window, operand 0, single buffered']
    #allocation3 [shape = 's32[1]{0}', space=sflag, size = 0x4, scoped, tag = 'scoped memory for tpu_custom_call.1']
    #allocation4 [shape = 's32[1]{0}', space=sflag, size = 0x4, scoped, tag = 'scoped memory for tpu_custom_call.1']
    #allocation5 [shape = 'u8[8192]{0}', space=vmem, size = 0x2000, scoped, tag = 'input window, operand 1, single buffered']
    #allocation6 [shape = 's32[1]{0}', space=sflag, size = 0x4, scoped, tag = 'scoped memory for tpu_custom_call.1']
    #allocation7 [shape = 'u8[1024]{0}', space=vmem, size = 0x400, scoped, tag = 'output window, operand 0, single buffered']
    #allocation8 [shape = 'u8[1024]{0}', space=vmem, size = 0x400, scoped, tag = 'output window, operand 1, single buffered']
    #allocation9 [shape = 's32[1]{0}', space=sflag, size = 0x4, scoped, tag = 'scoped memory for tpu_custom_call.1']
    %11 = vsyncpa [#allocation3], 0
    %12 = vsyncpa [#allocation6], 0
    %13 = vsyncpa [#allocation4], 0
    %14 = vsyncpa [#allocation9], 0
    // Predicated region
    $region2: #{tpu_custom_call.1} parent=1 // pred_check
      _
    $region3: #{tpu_custom_call.1} parent=1 // pred_check_branch
      %16 = sbr.rel (0) target = $region5
    $region4: #{tpu_custom_call.1} parent=1 // pred_region
      %s18 = ssub.s32 256, 256
      %19 = vsyncadd [#allocation3], %s18
      %s20 = sshll.u32 [#allocation2], 4
      %s21 = int_to_ptr.vmem [resolvable:$true] %s20
      %26 = dma.hbm_to_vmem [thread:$0]  %s0, 256, %s21, [#allocation3], 128, 128, 8
    $region5: #{tpu_custom_call.1} parent=1 // pred_fallthru
      _
    // Predicated region
    $region6: #{tpu_custom_call.1} parent=1 // pred_check
      _
    $region7: #{tpu_custom_call.1} parent=1 // pred_check_branch
      %28 = sbr.rel (0) target = $region9
    $region8: #{tpu_custom_call.1} parent=1 // pred_region
      %s30 = ssub.s32 256, 256
      %31 = vsyncadd [#allocation6], %s30
      %s32 = sshll.u32 [#allocation5], 4
      %s33 = int_to_ptr.vmem [resolvable:$true] %s32
      %38 = dma.hbm_to_vmem [thread:$0]  %s1, 256, %s33, [#allocation6], 128, 128, 8
    $region9: #{tpu_custom_call.1} parent=1 // pred_fallthru
      _
    // Predicated region
    $region10: #{tpu_custom_call.1} parent=1 // pred_check
      _
    $region11: #{tpu_custom_call.1} parent=1 // pred_check_branch
      %40 = sbr.rel (0) target = $region13
    $region12: #{tpu_custom_call.1} parent=1 // pred_region
      _
    $region13: #{tpu_custom_call.1} parent=1 // pred_fallthru
      _
    // Predicated region
    $region14: #{tpu_custom_call.1} parent=1 // pred_check
      _
    $region15: #{tpu_custom_call.1} parent=1 // pred_check_branch
      %42 = sbr.rel (0) target = $region17
    $region16: #{tpu_custom_call.1} parent=1 // pred_region
      _
    $region17: #{tpu_custom_call.1} parent=1 // pred_fallthru
      _
    // Predicated region
    $region18: #{tpu_custom_call.1} parent=1 // pred_check
      _
    $region19: #{tpu_custom_call.1} parent=1 // pred_check_branch
      %44 = sbr.rel (0) target = $region21
    $region20: #{tpu_custom_call.1} parent=1 // pred_region
      %45 = dma.done [#allocation3], 256
    $region21: #{tpu_custom_call.1} parent=1 // pred_fallthru
      _
    // Predicated region
    $region22: #{tpu_custom_call.1} parent=1 // pred_check
      _
    $region23: #{tpu_custom_call.1} parent=1 // pred_check_branch
      %47 = sbr.rel (0) target = $region25
    $region24: #{tpu_custom_call.1} parent=1 // pred_region
      %48 = dma.done [#allocation6], 256
    $region25: #{tpu_custom_call.1} parent=1 // pred_fallthru
      _
    %v49 = vld [vmem:[#allocation2] sm:$0xff]
    %v50 = vld [vmem:[#allocation2 + $0x8] sm:$0xff]
    %v51 = vld [vmem:[#allocation5] sm:$0xff]
    %v52 = vld [vmem:[#allocation5 + $0x8] sm:$0xff]
    %v53 = vld [vmem:[%s2] sm:$0x3]
    %v54 = vld [vmem:[%s3] sm:$0x1]
    %vm55 = vcmp.ne.s32.totalorder %v53, 0
    %v56 = vsel %vm55, 1, 0
    %v57 = vcvt.s32.f32 %v56
    %v59 = vlaneseq
    %v60 = vshrl.u32 %v59, 7
    %v61 = vsub.s32 0, %v60
    %v62 = vrot.slane %v54, %v61
    %v64 = vmul.f32 %v49, %v62
    %v65 = vmul.f32 %v50, %v62
    %vm66 = vcmask 261120
    %v67 = vsel %vm66, %v64, 0.0
    %68 = vadd.xlane.f32.xlu0 %v67
    %v69 = vpop.xlane.xlu0 %68
    %v70 = vsel %vm66, %v65, 0.0
    %71 = vadd.xlane.f32.xlu0 %v70
    %v72 = vpop.xlane.xlu0 %71
    %v75 = vlaneseq
    %v76 = vand.u32 %v75, 127
    %v77 = vlaneseq
    %v78 = vshrl.u32 %v77, 7
    %v79 = vsub.s32 %v76, %v78
    %v80 = vrot.slane %v69, %v79
    %v81 = vlaneseq
    %v82 = vshrl.u32 %v81, 7
    %v83 = vsub.s32 %v76, %v82
    %v84 = vrot.slane %v72, %v83
    %vm85 = vcmask 1041409
    %v86 = vsel %vm85, %v84, %v80
    %vm88 = vcmask 58368
    %v89 = vsel %vm88, %v86, -inf
    %90 = vmax.xlane.f32.xlu0 %v89
    %v91 = vpop.xlane.xlu0 %90
    %v93 = vlaneseq
    %v94 = vshrl.u32 %v93, 7
    %v95 = vsub.s32 0, %v94
    %v96 = vrot.slane %v91, %v95
    %v97 = vlaneseq
    %v98 = vshrl.u32 %v97, 7
    %v99 = vsub.s32 1, %v98
    %v100 = vrot.slane %v91, %v99
    %v103 = vsub.f32 %v69, %v96
    %v104 = vsub.f32 %v72, %v100
    %v105 = vmul.f32 %v103, 1.442695
    %v106 = vpow.pop %v105
    %v107 = vmul.f32 %v104, 1.442695
    %v108 = vpow.pop %v107
    %v110 = vlaneseq
    %v111 = vshrl.u32 %v110, 7
    %v112 = vsub.s32 0, %v111
    %v113 = vrot.slane %v57, %v112
    %115 = vbcast.lane.b32.xlu0 %v113, 256
    %v116 = vpop.permute.xlu0 %115
    %v117 = vlaneseq
    %v118 = vshrl.u32 %v117, 7
    %v119 = vsub.s32 1, %v118
    %v120 = vrot.slane %v57, %v119
    %122 = vbcast.lane.b32.xlu0 %v120, 256
    %v123 = vpop.permute.xlu0 %122
    %v126 = vmul.f32 %v106, %v116
    %v127 = vmul.f32 %v108, %v123
    %130 = vset.pattern.permute.xlu0 0
    %131 = vperm.xlu0 %130, %v126
    %v132 = vpop.permute.xlu0 %131
    %133 = vset.pattern.permute.xlu0 0
    %134 = vperm.xlu0 %133, %v127
    %v135 = vpop.permute.xlu0 %134
    %v136 = vlaneseq
    %v137 = vshrl.u32 %v136, 7
    %v138 = vsub.s32 %v76, %v137
    %v139 = vrot.slane %v132, %v138
    %v140 = vlaneseq
    %v141 = vshrl.u32 %v140, 7
    %v142 = vsub.s32 %v76, %v141
    %v143 = vrot.slane %v135, %v142
    %v144 = vsel %vm85, %v143, %v139
    %v146 = vsel %vm88, %v144, 0.0
    %147 = vadd.xlane.f32.xlu0 %v146
    %v148 = vpop.xlane.xlu0 %147
    %v149 = vrcp.pop %v148
    %v150 = vmul.f32 %v148, %v149
    %v151 = vsub.f32 2.0, %v150
    %v152 = vmul.f32 %v149, %v151
    %v154 = vlaneseq
    %v155 = vshrl.u32 %v154, 7
    %v156 = vsub.s32 0, %v155
    %v157 = vrot.slane %v152, %v156
    %v158 = vlaneseq
    %v159 = vshrl.u32 %v158, 7
    %v160 = vsub.s32 1, %v159
    %v161 = vrot.slane %v152, %v160
    %v164 = vmul.f32 %v126, %v157
    %v165 = vmul.f32 %v127, %v161
    %168 = vset.pattern.permute.xlu0 0
    %169 = vperm.xlu0 %168, %v164
    %v170 = vpop.permute.xlu0 %169
    %171 = vset.pattern.permute.xlu0 0
    %172 = vperm.xlu0 %171, %v165
    %v173 = vpop.permute.xlu0 %172
    %v174 = vlaneseq
    %v175 = vshrl.u32 %v174, 7
    %v176 = vsub.s32 %v76, %v175
    %v177 = vrot.slane %v170, %v176
    %v178 = vlaneseq
    %v179 = vshrl.u32 %v178, 7
    %v180 = vsub.s32 %v76, %v179
    %v181 = vrot.slane %v173, %v180
    %v182 = vsel %vm85, %v181, %v177
    %vm184 = vcmask 64512
    %v185 = vsel %vm184, %v182, 0.0
    %186 = vst [vmem:[#allocation7] sm:$0x3] %v185
    %v189 = vmul.f32 %v170, %v51
    %v190 = vmul.f32 %v173, %v52
    %vm191 = vcmask 130048
    %v192 = vsel %vm191, %v189, 0.0
    %v193 = vrot.slane %v192, 4
    %v194 = vadd.f32 %v192, %v193
    %v195 = vrot.slane %v194, 2
    %v196 = vadd.f32 %v194, %v195
    %v197 = vrot.slane %v196, 1
    %v198 = vadd.f32 %v196, %v197
    %v199 = vsel %vm191, %v190, 0.0
    %v200 = vrot.slane %v199, 4
    %v201 = vadd.f32 %v199, %v200
    %v202 = vrot.slane %v201, 2
    %v203 = vadd.f32 %v201, %v202
    %v204 = vrot.slane %v203, 1
    %v205 = vadd.f32 %v203, %v204
    %v208 = vsel %vm85, %v205, %v198
    %v210 = vsel %vm191, %v208, 0.0
    %211 = vst [vmem:[#allocation8] sm:$0x3] %v210
    // Predicated region
    $region26: #{tpu_custom_call.1} parent=1 // pred_check
      _
    $region27: #{tpu_custom_call.1} parent=1 // pred_check_branch
      %213 = sbr.rel (0) target = $region29
    $region28: #{tpu_custom_call.1} parent=1 // pred_region
      %s215 = ssub.s32 32, 32
      %216 = vsyncadd [#allocation4], %s215
      %s218 = sshll.u32 [#allocation7], 4
      %s219 = int_to_ptr.vmem [resolvable:$true] %s218
      %221 = dma.vmem_to_hbm [thread:$0]  %s219, 32, %s4, [#allocation4]
    $region29: #{tpu_custom_call.1} parent=1 // pred_fallthru
      _
    // Predicated region
    $region30: #{tpu_custom_call.1} parent=1 // pred_check
      _
    $region31: #{tpu_custom_call.1} parent=1 // pred_check_branch
      %223 = sbr.rel (0) target = $region33
    $region32: #{tpu_custom_call.1} parent=1 // pred_region
      %s225 = ssub.s32 32, 32
      %226 = vsyncadd [#allocation9], %s225
      %s228 = sshll.u32 [#allocation8], 4
      %s229 = int_to_ptr.vmem [resolvable:$true] %s228
      %231 = dma.vmem_to_hbm [thread:$0]  %s229, 32, %s5, [#allocation9]
    $region33: #{tpu_custom_call.1} parent=1 // pred_fallthru
      _
    // Predicated region
    $region34: #{tpu_custom_call.1} parent=1 // pred_check
      _
    $region35: #{tpu_custom_call.1} parent=1 // pred_check_branch
      %233 = sbr.rel (0) target = $region37
    $region36: #{tpu_custom_call.1} parent=1 // pred_region
      %234 = dma.done [#allocation4], 32
    $region37: #{tpu_custom_call.1} parent=1 // pred_fallthru
      _
    // Predicated region
    $region38: #{tpu_custom_call.1} parent=1 // pred_check
      _
    $region39: #{tpu_custom_call.1} parent=1 // pred_check_branch
      %236 = sbr.rel (0) target = $region41
    $region40: #{tpu_custom_call.1} parent=1 // pred_region
      %237 = dma.done [#allocation9], 32
    $region41: #{tpu_custom_call.1} parent=1 // pred_fallthru
      _
    %238 = vsyncpa [#allocation3], 1
    %239 = vsyncpa [#allocation6], 1
    %240 = vsyncpa [#allocation4], 1
    %241 = vsyncpa [#allocation9], 1

</llo_original>
